<compile_context>
chip_gen: v7x
topology: tpu7x:2x2x1
jax: 0.10.0
libtpu: 0.0.40
codegen_flags: <defaults>
</compile_context>

<pallas_src>
import jax
import jax.numpy as jnp
from jax.experimental import pallas as pl
from jax.experimental.pallas import tpu as pltpu


# ----------------------------------------------------------------------------
# Fast path: Flatten is an identity view — metadata-only, zero HBM traffic.
# ----------------------------------------------------------------------------
def flatten(x):
    """Exact equivalent of Flatten.forward: (N, ...) -> (N, prod(...))."""
    return x.reshape(x.shape[0], -1)


# ----------------------------------------------------------------------------
# Kernel path: lane-dense 2D tile copy (only when a materialized copy is needed).
# ----------------------------------------------------------------------------
def _copy_kernel(x_ref, o_ref):
    # Full-tile assignment: no reshape, no cast -> unmasked full-vreg stores,
    # purely DMA-bound.
    o_ref[...] = x_ref[...]


def _device_vmem_params():
    """(tile_footprint_budget_bytes, vmem_limit_bytes_or_None, is_multicore)."""
    try:
        kind = jax.devices()[0].device_kind.lower()
    except Exception:  # no TPU visible at trace time; be conservative
        kind = ""
    if "v7" in kind:
        # 64 MiB physical VMEM per TC, 2 TCs per chip.
        return 32 << 20, 48 << 20, True
    if "v6" in kind:
        # 128 MiB physical VMEM; default scoped limit is 32 MiB -> raise it.
        return 48 << 20, 64 << 20, False
    if "v5e" in kind or ("v5" in kind and "lite" in kind):
        # Stay inside v5e's 16 MiB default scoped VMEM.
        return 12 << 20, None, False
    # v5p / v4 / unknown: roomy but safe.
    return 32 << 20, 48 << 20, False


def _largest_aligned_tile(dim, unit, cap):
    """Largest multiple of `unit` that divides `dim` and is <= cap.

    Returns None if `dim` itself is not a multiple of `unit`.
    """
    if dim % unit != 0:
        return None
    cap = max(unit, min(dim, cap))
    best = unit
    for m in range(unit, cap + 1, unit):
        if dim % m == 0:
            best = m
    return best


def flatten_copy(x, *, alias_input=False):
    """Pallas copy-kernel form of Flatten: (N, ...) -> (N, prod(...)).

    Only use this when a real copy is required for composition; otherwise
    prefer `flatten()` (metadata-only).
    """
    n = x.shape[0]
    flat = 1
    for d in x.shape[1:]:
        flat *= d

    # Row-major flatten of a contiguous tensor is metadata-only for XLA.
    x2d = x.reshape(n, flat)

    isize = jnp.dtype(x.dtype).itemsize
    tile_budget, vmem_limit, multicore = _device_vmem_params()

    # dtype-aware sublane unit: f32 -> 8, bf16 -> 16, int8/fp8 -> 32.
    sub = max(8, 32 // isize)
    lane = 128

    # --- feature-dim tile: largest multiple of 128 dividing flat (<= cap) ----
    # Cap so that even a minimal-height tile fits the footprint budget
    # (4 buffers: double-buffered in + out).
    max_tf_cap = min(8192, max(lane, (tile_budget // (4 * sub * isize)) // lane * lane))
    tf = _largest_aligned_tile(flat, lane, max_tf_cap)
    if tf is None:
        # flat is not a multiple of 128: keep the whole contiguous row per tile
        # and let the VMEM budget bound the number of rows instead.
        # (For extreme row sizes one could pad flat to a 128 multiple here.)
        tf = flat

    # --- batch-dim tile: bounded by the VMEM footprint budget -----------------
    max_rows = tile_budget // (4 * tf * isize)
    max_rows = max(sub, (max_rows // sub) * sub)
    if n <= max_rows:
        tn = n  # full dim is always a legal block extent
    else:
        tn = _largest_aligned_tile(n, sub, max_rows) or max_rows

    # v7x: keep >=2 grid steps along a parallel axis so both TensorCores work.
    if multicore and pl.cdiv(n, tn) * pl.cdiv(flat, tf) < 2 and n >= 2 * sub:
        tn = ((n // 2 + sub - 1) // sub) * sub

    grid = (pl.cdiv(n, tn), pl.cdiv(flat, tf))

    cp_kwargs = dict(dimension_semantics=("parallel", "parallel"))
    if vmem_limit is not None:
        cp_kwargs["vmem_limit_bytes"] = int(vmem_limit)

    call_kwargs = {}
    if alias_input:
        # Reuse the input HBM buffer for the output. Opt-in: only beneficial
        # when x2d's buffer is actually donatable (e.g. created inside the
        # same jit); otherwise XLA inserts a defensive copy.
        call_kwargs["input_output_aliases"] = {0: 0}

    return pl.pallas_call(
        _copy_kernel,
        out_shape=jax.ShapeDtypeStruct((n, flat), x.dtype),
        grid_spec=pltpu.PrefetchScalarGridSpec(
            num_scalar_prefetch=0,
            grid=grid,
            in_specs=[pl.BlockSpec((tn, tf), lambda i, j: (i, j))],
            out_specs=pl.BlockSpec((tn, tf), lambda i, j: (i, j)),
        ),
        compiler_params=pltpu.CompilerParams(**cp_kwargs),
        cost_estimate=pl.CostEstimate(
            flops=0, transcendentals=0, bytes_accessed=2 * n * flat * isize
        ),
        **call_kwargs,
    )(x2d)


if __name__ == "__main__":
    key = jax.random.PRNGKey(0)
    # Small NCHW input consistent with how Flatten is used after conv layers.
    x = jax.random.normal(key, (2, 4, 16, 16), dtype=jnp.float32)
    ref = x.reshape(x.shape[0], -1)

    # Primary (recommended) path: metadata-only reshape, no kernel.
    out_view = flatten(x)
    jax.block_until_ready(out_view)
    assert out_view.shape == (2, 4 * 16 * 16), out_view.shape
    assert jnp.array_equal(out_view, ref), "reshape flatten mismatch vs reference"

    # Kernel path (kept for composition): lane-dense tiled copy.
    out_kernel = flatten_copy(x)
    jax.block_until_ready(out_kernel)
    assert out_kernel.shape == (2, 4 * 16 * 16), out_kernel.shape
    assert jnp.array_equal(out_kernel, ref), "Pallas flatten mismatch vs reference"

    print("KERNEL_OK")
</pallas_src>

<mosaic_0001>
module attributes {stable_mosaic.version = 11 : i64} {
  func.func @_copy_kernel(%arg0: i32, %arg1: i32, %arg2: memref<2x1024xf32, #tpu.memory_space<vmem>>, %arg3: memref<2x1024xf32, #tpu.memory_space<vmem>>) attributes {dimension_semantics = [#tpu.dimension_semantics<parallel>, #tpu.dimension_semantics<parallel>], iteration_bounds = array<i64: 1, 1>, scalar_prefetch = 0 : i64, scratch_operands = 0 : i64, tpu.core_type = #tpu.core_type<tc>, window_params = [{transform_indices = @transform_0, window_bounds = array<i64: 2, 1024>}, {transform_indices = @transform_1, window_bounds = array<i64: 2, 1024>}]} {
    %c0 = arith.constant 0 : index
    %c0_0 = arith.constant 0 : index
    %0 = vector.load %arg2[%c0, %c0_0] : memref<2x1024xf32, #tpu.memory_space<vmem>>, vector<2x1024xf32>
    %c0_1 = arith.constant 0 : index
    %c0_2 = arith.constant 0 : index
    %1 = vector.load %arg3[%c0_1, %c0_2] : memref<2x1024xf32, #tpu.memory_space<vmem>>, vector<2x1024xf32>
    tpu.vector_store %arg3[%c0_1, %c0_2], %0 {strides = array<i32>} : memref<2x1024xf32, #tpu.memory_space<vmem>>, vector<2x1024xf32>,
    return
  }
  func.func @transform_0(%arg0: i32, %arg1: i32) -> (i32, i32) {
    %c0_i32 = arith.constant 0 : i32
    return %arg0, %arg1 : i32, i32
  }
  func.func @transform_1(%arg0: i32, %arg1: i32) -> (i32, i32) {
    %c0_i32 = arith.constant 0 : i32
    return %arg0, %arg1 : i32, i32
  }
}

</mosaic_0001>

<llo_original>
// kernel: tpu_custom_call.1
$region0: #{tpu_custom_call.1}
  #allocation0 [shape = 'u32[]', space=smem, size = 0x4, offset = 0x4, fixed_abs, tag = 'smem constant byte address 0x4 - core index']
  #allocation1 [shape = 'u32[144,128]{1,0:T(1,128)}', space=vmem, size = 0x12000, scoped, tag = 'internal scratch']
  %s0 = inlined_call_operand.hbm [shape: f32[2,1024], index: 0, kind: input, shape index: {}]
  %s1 = inlined_call_operand.hbm [shape: f32[2,1024], index: 1, kind: output, shape index: {}]
  %s2 = sld [smem:[#allocation0]]
  $region18: #{tpu_custom_call.1} parent=0
    _
  %s4 = ssub.s32 1, %s2
  %s5 = scalar_select 0, %s4, %s2
  $region1: #{tpu_custom_call.1} parent=0
    #allocation2 [shape = 'u8[8192]{0}', space=vmem, size = 0x2000, scoped, tag = 'input window, operand 0, single buffered']
    #allocation3 [shape = 's32[1]{0}', space=sflag, size = 0x4, scoped, tag = 'scoped memory for tpu_custom_call.1']
    #allocation4 [shape = 's32[1]{0}', space=sflag, size = 0x4, scoped, tag = 'scoped memory for tpu_custom_call.1']
    #allocation5 [shape = 'u8[8192]{0}', space=vmem, size = 0x2000, scoped, tag = 'output window, operand 0, single buffered']
    %6 = vsyncpa [#allocation3], 0
    %7 = vsyncpa [#allocation4], 0
    // Predicated region
    $region2: #{tpu_custom_call.1} parent=1 // pred_check
      _
    $region3: #{tpu_custom_call.1} parent=1 // pred_check_branch
      %9 = sbr.rel (0) target = $region5
    $region4: #{tpu_custom_call.1} parent=1 // pred_region
      %s11 = ssub.s32 256, 256
      %12 = vsyncadd [#allocation3], %s11
      %s14 = sshll.u32 [#allocation2], 4
      %s15 = int_to_ptr.vmem [resolvable:$true] %s14
      %17 = dma.hbm_to_vmem [thread:$0]  %s0, 256, %s15, [#allocation3]
    $region5: #{tpu_custom_call.1} parent=1 // pred_fallthru
      _
    // Predicated region
    $region6: #{tpu_custom_call.1} parent=1 // pred_check
      _
    $region7: #{tpu_custom_call.1} parent=1 // pred_check_branch
      %19 = sbr.rel (0) target = $region9
    $region8: #{tpu_custom_call.1} parent=1 // pred_region
      %20 = dma.done [#allocation3], 256
    $region9: #{tpu_custom_call.1} parent=1 // pred_fallthru
      _
    %v21 = vld [vmem:[#allocation2] sm:$0xff]
    %v22 = vld [vmem:[#allocation2 + $0x8] sm:$0xff]
    %23 = vst [vmem:[#allocation5] sm:$0xff] %v21
    %24 = vst [vmem:[#allocation5 + $0x8] sm:$0xff] %v22
    // Predicated region
    $region10: #{tpu_custom_call.1} parent=1 // pred_check
      _
    $region11: #{tpu_custom_call.1} parent=1 // pred_check_branch
      %26 = sbr.rel (0) target = $region13
    $region12: #{tpu_custom_call.1} parent=1 // pred_region
      %s28 = ssub.s32 256, 256
      %29 = vsyncadd [#allocation4], %s28
      %s31 = sshll.u32 [#allocation5], 4
      %s32 = int_to_ptr.vmem [resolvable:$true] %s31
      %34 = dma.vmem_to_hbm [thread:$0]  %s32, 256, %s1, [#allocation4]
    $region13: #{tpu_custom_call.1} parent=1 // pred_fallthru
      _
    // Predicated region
    $region14: #{tpu_custom_call.1} parent=1 // pred_check
      _
    $region15: #{tpu_custom_call.1} parent=1 // pred_check_branch
      %36 = sbr.rel (0) target = $region17
    $region16: #{tpu_custom_call.1} parent=1 // pred_region
      %37 = dma.done [#allocation4], 256
    $region17: #{tpu_custom_call.1} parent=1 // pred_fallthru
      _
    %38 = vsyncpa [#allocation3], 1
    %39 = vsyncpa [#allocation4], 1

</llo_original>
